<compile_context>
chip_gen: v5e
topology: v5e:2x2
jax: 0.10.0
libtpu: 0.0.40
codegen_flags: <defaults>
</compile_context>

<pallas_src>
import jax
import jax.numpy as jnp
from jax.experimental import pallas as pl
from jax.experimental.pallas import tpu as pltpu

_LANE = 128


def _myloss_kernel(logits_ref, side_ref, acc_ref):
    i = pl.program_id(1)  # row-tile step within this core's shard (reduction axis)

    @pl.when(i == 0)
    def _():
        acc_ref[...] = jnp.zeros_like(acc_ref)

    logits = logits_ref[...].astype(jnp.float32)       # (tn, Kp) f32 (upcast in VMEM)
    side = side_ref[...]                               # (tn, 2)  f32
    gt = side[:, 0:1].astype(jnp.int32)                # exact: class ids < 2^24
    w_eff = side[:, 1:2]                               # = mask * weight[gt] (0 on pad rows)

    # numerically stable log-sum-exp over the class (lane) axis
    mx = jnp.max(logits, axis=-1, keepdims=True)
    lse = mx + jnp.log(jnp.sum(jnp.exp(logits - mx), axis=-1, keepdims=True))

    # one-hot selection of the target logit (padded classes have id >= K, never selected)
    class_ids = jax.lax.broadcasted_iota(jnp.int32, logits.shape, 1)     # (tn, Kp)
    logit_gt = jnp.sum(jnp.where(class_ids == gt, logits, 0.0),
                       axis=-1, keepdims=True)                           # (tn, 1)

    num_s = jnp.sum(w_eff * (lse - logit_gt))                            # scalar

    # accumulate the numerator partial sum into one lane-dense (1, 8, 128) block
    lane = jax.lax.broadcasted_iota(jnp.int32, acc_ref.shape, 2)
    sub = jax.lax.broadcasted_iota(jnp.int32, acc_ref.shape, 1)
    acc_ref[...] += jnp.where((sub == 0) & (lane == 0), num_s, 0.0)


def _default_num_splits():
    # A 2-way row split only pays off on chips with 2 TensorCores per device (v7x);
    # on single-TC v5e/v6e it is just an outer serial loop (pure overhead).
    try:
        kind = jax.devices()[0].device_kind.lower()
    except Exception:
        return 1
    return 2 if ("v7" in kind or "7x" in kind) else 1


def my_loss(outputs, labels, masks, weight, *, tn=None, num_splits=None,
            vmem_limit_bytes=32 * 1024 * 1024):
    """outputs: [B, m, K] (f32 or bf16), labels: [B, m+1] int, masks: [B, m+1], weight: [K].

    Precondition (same as the PyTorch reference): at least one position with
    masks[b, j] != 0 and j > 0 must exist, otherwise the result is NaN (0/0).
    """
    B, m, K = outputs.shape
    N = B * m

    # Glue (pure reshapes / static slices, no data-dependent gather):
    #   index_pre = x*m + y - 1 with y in 1..m  -> outputs[:, y-1, :] == all rows
    #   index_lab = x*(m+1) + y with y in 1..m  -> labels[:, 1:]
    logits_flat = outputs.reshape(N, K)                                   # [N, K] keep dtype
    gt_flat = labels[:, 1:].reshape(N).astype(jnp.int32)                  # [N]
    valid_flat = (masks[:, 1:] != 0).reshape(N).astype(jnp.float32)       # [N]
    # effective per-row weight (mask * class weight), computed once in the wrapper
    w_eff = valid_flat * jnp.take(weight.astype(jnp.float32), gt_flat)    # [N]

    # denominator computed wrapper-side (tiny [N] reduce) — kernel only accumulates num
    den = jnp.sum(w_eff)

    # lane-pad the class axis with a very negative value (exact logsumexp, one-hot
    # never selects padded classes)
    K_pad = ((K + _LANE - 1) // _LANE) * _LANE
    if K_pad != K:
        logits_flat = jnp.pad(logits_flat, ((0, 0), (0, K_pad - K)),
                              constant_values=-1e9)

    # pack gt (as exact float) and w_eff into one (N, 2) f32 side input
    side = jnp.stack([gt_flat.astype(jnp.float32), w_eff], axis=1)        # [N, 2]

    if num_splits is None:
        num_splits = _default_num_splits()

    itemsize = jnp.dtype(logits_flat.dtype).itemsize
    # VMEM per row: 2x double-buffered inputs (logits tile + side tile)
    # + ~3 live f32 (tn, K_pad) temporaries (upcast, exp, one-hot select).
    vmem_per_row = 2 * (K_pad * itemsize + 2 * 4) + 3 * K_pad * 4

    per_core_rows = -(-N // num_splits)
    tn_data = max(8, ((per_core_rows + 7) // 8) * 8)
    if tn is None:
        budget = int(vmem_limit_bytes * 0.7)          # headroom for pipeline state
        tn_budget = max(8, min(1024, (budget // vmem_per_row // 8) * 8))
        tn = min(tn_budget, tn_data)
    tn = max(8, (tn // 8) * 8)

    # Pad rows so N is a multiple of num_splits * tn; padded rows have w_eff = 0,
    # so they contribute nothing to the numerator (denominator already excludes them).
    chunk = num_splits * tn
    N_pad = ((N + chunk - 1) // chunk) * chunk
    if N_pad != N:
        pad = N_pad - N
        logits_flat = jnp.pad(logits_flat, ((0, pad), (0, 0)))
        side = jnp.pad(side, ((0, pad), (0, 0)))

    steps = N_pad // chunk                            # row tiles per core

    def row_map(c, i):
        return (c * steps + i, 0)

    cost = pl.CostEstimate(
        flops=6 * N_pad * K_pad,
        transcendentals=N_pad * K_pad + N_pad,
        bytes_accessed=N_pad * (K_pad * itemsize + 8) + num_splits * 8 * 128 * 4,
    )

    acc = pl.pallas_call(
        _myloss_kernel,
        out_shape=jax.ShapeDtypeStruct((num_splits, 8, 128), jnp.float32),
        grid_spec=pltpu.PrefetchScalarGridSpec(
            num_scalar_prefetch=0,
            grid=(num_splits, steps),
            in_specs=[
                pl.BlockSpec((tn, K_pad), row_map),   # logits tile (HBM dtype)
                pl.BlockSpec((tn, 2), row_map),       # packed [gt_as_f32, w_eff] tile
            ],
            out_specs=pl.BlockSpec((1, 8, 128), lambda c, i: (c, 0, 0)),
        ),
        compiler_params=pltpu.CompilerParams(
            dimension_semantics=("parallel", "arbitrary"),
            vmem_limit_bytes=vmem_limit_bytes,
        ),
        cost_estimate=cost,
    )(logits_flat, side)

    num = jnp.sum(acc[:, 0, 0])
    return (num / den).astype(jnp.float32)


def my_loss_reference(outputs, labels, masks, weight):
    """Pure-JAX reference (same masked weighted-mean cross entropy)."""
    B, m, K = outputs.shape
    logits = outputs.reshape(B * m, K).astype(jnp.float32)
    gt = labels[:, 1:].reshape(-1).astype(jnp.int32)
    valid = (masks[:, 1:] != 0).reshape(-1).astype(jnp.float32)
    lse = jax.scipy.special.logsumexp(logits, axis=-1)
    nll = lse - jnp.take_along_axis(logits, gt[:, None], axis=-1)[:, 0]
    w = weight.astype(jnp.float32)[gt]
    return jnp.sum(valid * w * nll) / jnp.sum(valid * w)


if __name__ == "__main__":
    key = jax.random.PRNGKey(0)

    # ---- Test 1: small f32 case (single tile, K < 128 -> lane-padded) ----
    k1, k2, k3, k4 = jax.random.split(key, 4)
    B, m, K = 2, 8, 32           # outputs: [B, m, K]; labels/masks: [B, m+1]
    outputs = jax.random.normal(k1, (B, m, K), dtype=jnp.float32)
    labels = jax.random.randint(k2, (B, m + 1), 0, K, dtype=jnp.int32)
    masks = (jax.random.uniform(k3, (B, m + 1)) > 0.3).astype(jnp.int32)
    masks = masks.at[:, 1].set(1)  # ensure denominator > 0
    weight = jax.random.uniform(k4, (K,), minval=0.5, maxval=1.5, dtype=jnp.float32)

    loss = jax.block_until_ready(my_loss(outputs, labels, masks, weight))
    ref = jax.block_until_ready(my_loss_reference(outputs, labels, masks, weight))
    assert jnp.allclose(loss, ref, rtol=1e-5, atol=1e-5), (loss, ref)

    # ---- Test 2: bf16, multi-step accumulator, row padding, 2-way split ----
    k5, k6, k7, k8 = jax.random.split(jax.random.PRNGKey(0), 4)
    B2, m2, K2 = 3, 21, 160      # N = 63 rows, K padded 160 -> 256
    outputs2 = jax.random.normal(k5, (B2, m2, K2), dtype=jnp.bfloat16)
    labels2 = jax.random.randint(k6, (B2, m2 + 1), 0, K2, dtype=jnp.int32)
    masks2 = (jax.random.uniform(k7, (B2, m2 + 1)) > 0.4).astype(jnp.int32)
    masks2 = masks2.at[:, 1].set(1)
    weight2 = jax.random.uniform(k8, (K2,), minval=0.5, maxval=1.5, dtype=jnp.float32)

    # tn=8, num_splits=2 forces N_pad=64, steps=4 per core: exercises pl.when init,
    # multi-step accumulation, row padding, K padding and the bf16 upcast path.
    loss2 = jax.block_until_ready(
        my_loss(outputs2, labels2, masks2, weight2, tn=8, num_splits=2))
    ref2 = jax.block_until_ready(
        my_loss_reference(outputs2, labels2, masks2, weight2))
    assert jnp.allclose(loss2, ref2, rtol=1e-4, atol=1e-4), (loss2, ref2)

    print("KERNEL_OK")
</pallas_src>

<mosaic_0001>
module attributes {stable_mosaic.version = 11 : i64} {
  func.func @_myloss_kernel(%arg0: i32, %arg1: i32, %arg2: memref<16x128xf32, #tpu.memory_space<vmem>>, %arg3: memref<16x2xf32, #tpu.memory_space<vmem>>, %arg4: memref<1x8x128xf32, #tpu.memory_space<vmem>>) attributes {dimension_semantics = [#tpu.dimension_semantics<parallel>, #tpu.dimension_semantics<arbitrary>], iteration_bounds = array<i64: 1, 1>, scalar_prefetch = 0 : i64, scratch_operands = 0 : i64, tpu.core_type = #tpu.core_type<tc>, window_params = [{transform_indices = @transform_0, window_bounds = array<i64: 16, 128>}, {transform_indices = @transform_1, window_bounds = array<i64: 16, 2>}, {transform_indices = @transform_2, window_bounds = array<i64: 1, 8, 128>}]} {
    %c0_i32 = arith.constant 0 : i32
    %0 = arith.cmpi eq, %arg1, %c0_i32 : i32
    %1 = arith.extui %0 : i1 to i32
    %c0_i32_0 = arith.constant 0 : i32
    %2 = arith.cmpi ne, %1, %c0_i32_0 : i32
    scf.if %2 {
      %cst_17 = arith.constant 0.000000e+00 : f32
      %43 = vector.broadcast %cst_17 : f32 to vector<1x8x128xf32>
      %c0_18 = arith.constant 0 : index
      %c0_19 = arith.constant 0 : index
      %c0_20 = arith.constant 0 : index
      %44 = vector.load %arg4[%c0_18, %c0_19, %c0_20] : memref<1x8x128xf32, #tpu.memory_space<vmem>>, vector<1x8x128xf32>
      tpu.vector_store %arg4[%c0_18, %c0_19, %c0_20], %43 {strides = array<i32>} : memref<1x8x128xf32, #tpu.memory_space<vmem>>, vector<1x8x128xf32>,
    } else {
    }
    %c0 = arith.constant 0 : index
    %c0_1 = arith.constant 0 : index
    %3 = vector.load %arg2[%c0, %c0_1] : memref<16x128xf32, #tpu.memory_space<vmem>>, vector<16x128xf32>
    %c0_2 = arith.constant 0 : index
    %c0_3 = arith.constant 0 : index
    %4 = vector.load %arg3[%c0_2, %c0_3] : memref<16x2xf32, #tpu.memory_space<vmem>>, vector<16x2xf32>
    %5 = vector.extract_strided_slice %4 {offsets = [0, 0], sizes = [16, 1], strides = [1, 1]} : vector<16x2xf32> to vector<16x1xf32>
    %6 = arith.fptosi %5 : vector<16x1xf32> to vector<16x1xi32>
    %7 = vector.extract_strided_slice %4 {offsets = [0, 1], sizes = [16, 1], strides = [1, 1]} : vector<16x2xf32> to vector<16x1xf32>
    %cst = arith.constant dense<0xFF800000> : vector<16xf32>
    %8 = vector.multi_reduction <maximumf>, %3, %cst [1] : vector<16x128xf32> to vector<16xf32>
    %9 = vector.shape_cast %8 : vector<16xf32> to vector<16x1xf32>
    %10 = vector.broadcast %9 : vector<16x1xf32> to vector<16x128xf32>
    %11 = arith.subf %3, %10 : vector<16x128xf32>
    %12 = math.exp %11 : vector<16x128xf32>
    %cst_4 = arith.constant dense<0.000000e+00> : vector<16xf32>
    %13 = vector.multi_reduction <add>, %12, %cst_4 [1] : vector<16x128xf32> to vector<16xf32>
    %14 = vector.shape_cast %13 : vector<16xf32> to vector<16x1xf32>
    %15 = math.log %14 : vector<16x1xf32>
    %16 = arith.addf %9, %15 : vector<16x1xf32>
    %17 = tpu.iota {dimensions = array<i32: 1>} : vector<16x128xi32>
    %18 = vector.broadcast %6 : vector<16x1xi32> to vector<16x128xi32>
    %19 = arith.cmpi eq, %17, %18 : vector<16x128xi32>
    %cst_5 = arith.constant 0.000000e+00 : f32
    %20 = vector.broadcast %cst_5 : f32 to vector<16x128xf32>
    %21 = arith.select %19, %3, %20 : vector<16x128xi1>, vector<16x128xf32>
    %cst_6 = arith.constant dense<0.000000e+00> : vector<16xf32>
    %22 = vector.multi_reduction <add>, %21, %cst_6 [1] : vector<16x128xf32> to vector<16xf32>
    %23 = vector.shape_cast %22 : vector<16xf32> to vector<16x1xf32>
    %24 = arith.subf %16, %23 : vector<16x1xf32>
    %25 = arith.mulf %7, %24 : vector<16x1xf32>
    %26 = vector.shape_cast %25 : vector<16x1xf32> to vector<1x16x1xf32>
    %cst_7 = arith.constant dense<0.000000e+00> : vector<1xf32>
    %27 = vector.multi_reduction <add>, %26, %cst_7 [1, 2] : vector<1x16x1xf32> to vector<1xf32>
    %28 = vector.shape_cast %27 : vector<1xf32> to vector<1x1x1xf32>
    %29 = vector.extract %28[0, 0, 0] : f32 from vector<1x1x1xf32>
    %30 = tpu.iota {dimensions = array<i32: 2>} : vector<1x8x128xi32>
    %31 = tpu.iota {dimensions = array<i32: 1>} : vector<1x8x128xi32>
    %c0_8 = arith.constant 0 : index
    %c0_9 = arith.constant 0 : index
    %c0_10 = arith.constant 0 : index
    %32 = vector.load %arg4[%c0_8, %c0_9, %c0_10] : memref<1x8x128xf32, #tpu.memory_space<vmem>>, vector<1x8x128xf32>
    %c0_i32_11 = arith.constant 0 : i32
    %33 = vector.broadcast %c0_i32_11 : i32 to vector<1x8x128xi32>
    %34 = arith.cmpi eq, %31, %33 : vector<1x8x128xi32>
    %c0_i32_12 = arith.constant 0 : i32
    %35 = vector.broadcast %c0_i32_12 : i32 to vector<1x8x128xi32>
    %36 = arith.cmpi eq, %30, %35 : vector<1x8x128xi32>
    %37 = arith.andi %34, %36 : vector<1x8x128xi1>
    %cst_13 = arith.constant 0.000000e+00 : f32
    %38 = vector.broadcast %29 : f32 to vector<1x8x128xf32>
    %39 = vector.broadcast %cst_13 : f32 to vector<1x8x128xf32>
    %40 = arith.select %37, %38, %39 : vector<1x8x128xi1>, vector<1x8x128xf32>
    %41 = arith.addf %32, %40 : vector<1x8x128xf32>
    %c0_14 = arith.constant 0 : index
    %c0_15 = arith.constant 0 : index
    %c0_16 = arith.constant 0 : index
    %42 = vector.load %arg4[%c0_14, %c0_15, %c0_16] : memref<1x8x128xf32, #tpu.memory_space<vmem>>, vector<1x8x128xf32>
    tpu.vector_store %arg4[%c0_14, %c0_15, %c0_16], %41 {strides = array<i32>} : memref<1x8x128xf32, #tpu.memory_space<vmem>>, vector<1x8x128xf32>,
    return
  }
  func.func @transform_0(%arg0: i32, %arg1: i32) -> (i32, i32) {
    %c1_i32 = arith.constant 1 : i32
    %0 = arith.muli %arg0, %c1_i32 : i32
    %1 = arith.addi %0, %arg1 : i32
    %c0_i32 = arith.constant 0 : i32
    %c0_i32_0 = arith.constant 0 : i32
    return %1, %c0_i32 : i32, i32
  }
  func.func @transform_1(%arg0: i32, %arg1: i32) -> (i32, i32) {
    %c1_i32 = arith.constant 1 : i32
    %0 = arith.muli %arg0, %c1_i32 : i32
    %1 = arith.addi %0, %arg1 : i32
    %c0_i32 = arith.constant 0 : i32
    %c0_i32_0 = arith.constant 0 : i32
    return %1, %c0_i32 : i32, i32
  }
  func.func @transform_2(%arg0: i32, %arg1: i32) -> (i32, i32, i32) {
    %c0_i32 = arith.constant 0 : i32
    %c0_i32_0 = arith.constant 0 : i32
    %c0_i32_1 = arith.constant 0 : i32
    return %arg0, %c0_i32, %c0_i32_0 : i32, i32, i32
  }
}

</mosaic_0001>

<llo_original>
// kernel: tpu_custom_call.1
$region0: #{tpu_custom_call.1}
  #allocation0 [shape = 'u32[]', space=smem, size = 0x4, offset = 0x4, fixed_abs, tag = 'smem constant byte address 0x4 - core index']
  #allocation1 [shape = 'u32[72,128]{1,0:T(1,128)}', space=vmem, size = 0x9000, scoped, tag = 'internal scratch']
  %s0 = inlined_call_operand.vmem [shape: f32[16,128], index: 0, kind: input, shape index: {}]
  %s1 = inlined_call_operand.vmem [shape: f32[16,2], index: 1, kind: input, shape index: {}]
  %s2 = inlined_call_operand.hbm [shape: f32[1,8,128], index: 2, kind: output, shape index: {}]
  %s3 = sld [smem:[#allocation0]]
  $region22: #{tpu_custom_call.1} parent=0
    _
  %s5 = ssub.s32 1, %s3
  %s6 = scalar_select 0, %s5, %s3
  $region1: #{tpu_custom_call.1} parent=0
    #allocation2 [shape = 'u8[4096]{0}', space=vmem, size = 0x1000, scoped, tag = 'output window, operand 0, single buffered']
    #allocation3 [shape = 's32[1]{0}', space=sflag, size = 0x4, scoped, tag = 'scoped memory for tpu_custom_call.1']
    %7 = vsyncpa [#allocation3], 0
    // Predicated region
    $region2: #{tpu_custom_call.1} parent=1 // pred_check
      _
    $region3: #{tpu_custom_call.1} parent=1 // pred_check_branch
      %9 = sbr.rel (0) target = $region5
    $region4: #{tpu_custom_call.1} parent=1 // pred_region
      %s10 = sadd.s32 0, 0
      %s11 = smul.u32 2, %s10
      %p12 = scmp.lt.s32.totalorder %s11, 1
      %s13 = scalar_select %p12, %s11, 1
      %s14 = smul.addr %s13, 8
      %s15 = scalar_lea.vmem %s0, %s14
      %s16 = sadd.s32 0, 0
      %s17 = smul.u32 2, %s16
    $region5: #{tpu_custom_call.1} parent=1 // pred_fallthru
      _
    // Predicated region
    $region6: #{tpu_custom_call.1} parent=1 // pred_check
      _
    $region7: #{tpu_custom_call.1} parent=1 // pred_check_branch
      %19 = sbr.rel (0) target = $region9
    $region8: #{tpu_custom_call.1} parent=1 // pred_region
      %s20 = sadd.s32 0, 0
      %s21 = smul.u32 2, %s20
      %p22 = scmp.lt.s32.totalorder %s21, 1
      %s23 = scalar_select %p22, %s21, 1
      %s24 = smul.addr %s23, 8
      %s25 = scalar_lea.vmem %s1, %s24
      %s26 = sadd.s32 0, 0
      %s27 = smul.u32 2, %s26
    $region9: #{tpu_custom_call.1} parent=1 // pred_fallthru
      _
    %s28 = sadd.s32 0, 0
    %s29 = smul.u32 2, %s28
    %p30 = scmp.lt.s32.totalorder %s29, 1
    %s31 = scalar_select %p30, %s29, 1
    %s32 = smul.addr %s31, 8
    %s33 = scalar_lea.vmem %s0, %s32
    %s34 = sadd.s32 0, 0
    %s35 = smul.u32 2, %s34
    %p36 = scmp.lt.s32.totalorder %s35, 1
    %s37 = scalar_select %p36, %s35, 1
    %s38 = smul.addr %s37, 8
    %s39 = scalar_lea.vmem %s1, %s38
    %s40 = sadd.s32 0, 0
    %s41 = smul.u32 2, %s40
    %p42 = scmp.lt.s32.totalorder %s41, 1
    %s43 = scalar_select %p42, %s41, 1
    %s44 = smul.addr %s43, 8
    %s45 = scalar_lea.vmem %s0, %s44
    %s46 = sadd.s32 0, 0
    %s47 = smul.u32 2, %s46
    %s48 = sadd.s32 0, 0
    %s49 = smul.u32 2, %s48
    %p50 = scmp.lt.s32.totalorder %s49, 1
    %s51 = scalar_select %p50, %s49, 1
    %s52 = smul.addr %s51, 8
    %s53 = scalar_lea.vmem %s1, %s52
    %s54 = sadd.s32 0, 0
    %s55 = smul.u32 2, %s54
    %p56 = scmp.eq.s32.totalorder 0, 0
    // Predicated region
    $region10: #{tpu_custom_call.1} parent=1 // pred_check
      %p57 = pneg %p56
    $region11: #{tpu_custom_call.1} parent=1 // pred_check_branch
      %59 = sbr.rel (%p57) target = $region13
    $region12: #{tpu_custom_call.1} parent=1 // pred_region
      %60 = vst [vmem:[#allocation2] sm:$0xff] 0.0
    $region13: #{tpu_custom_call.1} parent=1 // pred_fallthru
      _
    %v61 = vld [vmem:[%s45] sm:$0xff]
    %v62 = vld [vmem:[%s45 + $0x8] sm:$0xff]
    %v63 = vld [vmem:[%s53] sm:$0xff]
    %v64 = vld [vmem:[%s53 + $0x8] sm:$0xff]
    %v65 = vcvt.f32.s32.to.zero.pseudo %v63
    %v66 = vcvt.f32.s32.to.zero.pseudo %v64
    %67 = vmax.xlane.f32.xlu0 %v61
    %v68 = vpop.xlane.xlu0 %67
    %69 = vmax.xlane.f32.xlu0 %v62
    %v70 = vpop.xlane.xlu0 %69
    %v71 = vsub.f32 %v61, %v68
    %v72 = vsub.f32 %v62, %v70
    %v73 = vmul.f32 %v71, 1.442695
    %v74 = vpow.pop %v73
    %v75 = vmul.f32 %v72, 1.442695
    %v76 = vpow.pop %v75
    %77 = vadd.xlane.f32.xlu0 %v74
    %v78 = vpop.xlane.xlu0 %77
    %79 = vadd.xlane.f32.xlu0 %v76
    %v80 = vpop.xlane.xlu0 %79
    %v81 = vlog2.pop %v78
    %v82 = vmul.f32 %v81, 0.6931472
    %v83 = vlog2.pop %v80
    %v84 = vmul.f32 %v83, 0.6931472
    %v85 = vadd.f32 %v68, %v82
    %v86 = vadd.f32 %v70, %v84
    %v87 = vlaneseq
    %v88 = vand.u32 %v87, 127
    %89 = vset.pattern.permute.xlu0 0
    %90 = vperm.xlu0 %89, %v65
    %v91 = vpop.permute.xlu0 %90
    %92 = vset.pattern.permute.xlu0 0
    %93 = vperm.xlu0 %92, %v66
    %v94 = vpop.permute.xlu0 %93
    %vm95 = vcmp.eq.s32.totalorder %v88, %v91
    %vm96 = vcmp.eq.s32.totalorder %v88, %v94
    %v97 = vsel %vm95, %v61, 0.0
    %v98 = vsel %vm96, %v62, 0.0
    %99 = vadd.xlane.f32.xlu0 %v97
    %v100 = vpop.xlane.xlu0 %99
    %101 = vadd.xlane.f32.xlu0 %v98
    %v102 = vpop.xlane.xlu0 %101
    %v103 = vsub.f32 %v85, %v100
    %v104 = vsub.f32 %v86, %v102
    %v105 = vmul.f32 %v63, %v103
    %v106 = vmul.f32 %v64, %v104
    %109 = vrot.lane.b32.xlu0 %v105, 127
    %v110 = vpop.permute.xlu0 %109
    %111 = vrot.lane.b32.xlu0 %v106, 127
    %v112 = vpop.permute.xlu0 %111
    %vm115 = vcmask 7168
    %v116 = vsel %vm115, %v110, 0.0
    %v117 = vsel %vm115, %v112, 0.0
    %v118 = vadd.f32 %v116, %v117
    %119 = vadd.xlane.f32.xlu0 %v118
    %v120 = vpop.xlane.xlu0 %119
    %v121 = vrot.slane %v120, 4
    %v122 = vadd.f32 %v120, %v121
    %v123 = vrot.slane %v122, 2
    %v124 = vadd.f32 %v122, %v123
    %v125 = vrot.slane %v124, 1
    %v126 = vadd.f32 %v124, %v125
    %s127 = vtos %v126
    %v128 = vlaneseq
    %v129 = vshrl.u32 %v128, 7
    %v130 = vld [vmem:[#allocation2] sm:$0xff]
    %vm131 = vcmp.eq.s32.totalorder %v129, 0
    %vm132 = vcmp.eq.s32.totalorder %v88, 0
    %vm133 = vmand %vm131, %vm132
    %v134 = vstv %s127
    %v135 = vsel %vm133, %v134, 0.0
    %v136 = vadd.f32 %v130, %v135
    %137 = vst [vmem:[#allocation2] sm:$0xff] %v136
    // Predicated region
    $region14: #{tpu_custom_call.1} parent=1 // pred_check
      _
    $region15: #{tpu_custom_call.1} parent=1 // pred_check_branch
      %139 = sbr.rel (0) target = $region17
    $region16: #{tpu_custom_call.1} parent=1 // pred_region
      %141 = vsyncadd [#allocation3], 0
      %s143 = sshll.u32 [#allocation2], 4
      %s144 = int_to_ptr.vmem [resolvable:$true] %s143
      %s145 = sshll.u32 %s2, 4
      %s146 = int_to_ptr.hbm [resolvable:$true] %s145
      %148 = dma.vmem_to_hbm [thread:$0]  %s144, 128, %s146, [#allocation3]
    $region17: #{tpu_custom_call.1} parent=1 // pred_fallthru
      _
    // Predicated region
    $region18: #{tpu_custom_call.1} parent=1 // pred_check
      _
    $region19: #{tpu_custom_call.1} parent=1 // pred_check_branch
      %150 = sbr.rel (0) target = $region21
    $region20: #{tpu_custom_call.1} parent=1 // pred_region
      %152 = dma.done [#allocation3], 128
    $region21: #{tpu_custom_call.1} parent=1 // pred_fallthru
      _
    %153 = vsyncpa [#allocation3], 1

</llo_original>
